<compile_context>
chip_gen: v5e
topology: v5e:2x2
jax: 0.10.0
libtpu: 0.0.40
codegen_flags: <defaults>
</compile_context>

<pallas_src>
import functools

import jax
import jax.numpy as jnp
from jax.experimental import pallas as pl
from jax.experimental.pallas import tpu as pltpu


def _cdiv(a: int, b: int) -> int:
    return -(-a // b)


def _round_up(x: int, m: int) -> int:
    return _cdiv(x, m) * m


def _make_bce_kernel(smoothing: float, tile_v: int, v_rem: int):
    """v_rem = V % tile_v (0 => every vocab block is full)."""

    def _accumulate(x_ref, acc_ref, ncols: int):
        # Add sum-over-columns of [max(x,0) - smoothing*x + log(1+exp(-|x|))] for the first
        # `ncols` (static) columns of this block into the lane-dense [tb, 128] accumulator.
        tb = acc_ref.shape[0]
        s = jnp.zeros((tb, 128), jnp.float32)          # linear terms, per lane position
        p = jnp.ones((tb, 128), jnp.float32)           # prod of (1 + exp(-|x|)) factors
        n_chunks = _cdiv(ncols, 128)
        for k in range(n_chunks):
            lo = k * 128
            xc = x_ref[:, lo:lo + 128].astype(jnp.float32)       # [tb, 128], f32 math
            lin = jnp.maximum(xc, 0.0) - smoothing * xc
            u = jnp.exp(-jnp.abs(xc))                            # in (0, 1]
            if lo + 128 > ncols:                                 # single partial chunk
                ok = jax.lax.broadcasted_iota(jnp.int32, (tb, 128), 1) < (ncols - lo)
                lin = jnp.where(ok, lin, 0.0)
                u = jnp.where(ok, u, 0.0)                        # factor -> 1, log -> 0
            s = s + lin
            p = p * (1.0 + u)
        # Factors <= 2, at most tile_v/128 (<= 64) of them: no overflow.  One log per
        # 128-lane group instead of one per element.
        acc_ref[...] += s + jnp.log(p)

    def kernel(x_ref, out_ref, acc_ref):
        j = pl.program_id(1)
        last = pl.num_programs(1) - 1

        @pl.when(j == 0)
        def _init():
            acc_ref[...] = jnp.zeros_like(acc_ref)

        if v_rem == 0:
            # Every vocab block is full: no masking anywhere.
            _accumulate(x_ref, acc_ref, tile_v)
        else:
            @pl.when(j != last)
            def _full_block():
                _accumulate(x_ref, acc_ref, tile_v)

            @pl.when(j == last)
            def _partial_block():
                _accumulate(x_ref, acc_ref, v_rem)

        @pl.when(j == last)
        def _finalize():
            # Single cross-lane (XLU) reduce + lane-sparse store per row tile.
            out_ref[...] = jnp.sum(acc_ref[...], axis=-1, keepdims=True)

    return kernel


@functools.partial(jax.jit, static_argnames=("pad_idx", "smoothing", "mask_pad",
                                              "block_b", "block_v"))
def binary_cross_entropy(logits, targets, *, pad_idx: int = 0, smoothing: float = 0.1,
                         mask_pad: bool = True, block_b: int = 128, block_v: int = 4096):
    """Per-token loss [B], matching BinaryCrossEntropy.forward(logits, targets, mask_pad)."""
    assert targets.shape[0] == logits.shape[0]
    B, V = logits.shape

    itemsize = jnp.dtype(logits.dtype).itemsize
    row_align = 8 * max(1, 4 // itemsize)          # 8 for f32, 16 for bf16, 32 for 8-bit

    # >= 2 batch tiles whenever B allows it, so the "parallel" axis can shard across both
    # v7x TensorCores (single-TC chips are unaffected).  tb stays sublane-tile aligned.
    tb = min(_round_up(block_b, row_align),
             _round_up(max(_cdiv(B, 2), 1), row_align))
    tv = min(_round_up(block_v, 128), _round_up(V, 128))
    grid = (_cdiv(B, tb), _cdiv(V, tv))
    v_rem = V % tv                                  # 0 => no column masking anywhere

    kernel = _make_bce_kernel(float(smoothing), tv, v_rem)

    row_sums = pl.pallas_call(
        kernel,
        out_shape=jax.ShapeDtypeStruct((B, 1), jnp.float32),
        grid_spec=pltpu.PrefetchScalarGridSpec(
            num_scalar_prefetch=0,
            grid=grid,
            in_specs=[pl.BlockSpec((tb, tv), lambda i, j: (i, j))],     # streamed logits
            out_specs=pl.BlockSpec((tb, 1), lambda i, j: (i, 0)),       # per-row result
            scratch_shapes=[pltpu.VMEM((tb, 128), jnp.float32)],        # lane-dense acc
        ),
        compiler_params=pltpu.CompilerParams(
            dimension_semantics=("parallel", "arbitrary"),
            vmem_limit_bytes=32 * 1024 * 1024,
        ),
    )(logits)[:, 0]

    # Target-column correction hoisted out of the kernel: truth is 1 (not `smoothing`)
    # at exactly one column per row, so subtract (1 - smoothing) * logits[b, targets[b]].
    # This is a B-element gather, negligible next to the [B, V] stream.
    tgt = targets.astype(jnp.int32)
    tgt_logit = jnp.take_along_axis(logits, tgt[:, None], axis=1)[:, 0].astype(jnp.float32)
    loss = row_sums - (1.0 - smoothing) * tgt_logit
    if mask_pad:
        loss = jnp.where(tgt == pad_idx, 0.0, loss)
    return loss


def _reference_bce(logits, targets, *, pad_idx, smoothing, mask_pad=True):
    """Pure-JAX reference mirroring the PyTorch module."""
    B, V = logits.shape
    x = logits.astype(jnp.float32)
    truth = jnp.full((B, V), smoothing, jnp.float32).at[jnp.arange(B), targets].set(1.0)
    loss = jnp.maximum(x, 0.0) - x * truth + jnp.log1p(jnp.exp(-jnp.abs(x)))
    if mask_pad:
        loss = jnp.where((targets == pad_idx)[:, None], 0.0, loss)
    return jnp.sum(loss, axis=-1)


if __name__ == "__main__":
    # Small, deliberately unaligned shapes: partial batch rows (13 % 8 != 0), several vocab
    # blocks with a sub-128 tail (600 % 256 = 88), plus a pad-index row.
    B, V = 13, 600
    pad_idx = 0
    smoothing = 0.1

    key = jax.random.PRNGKey(0)
    k_x, k_t = jax.random.split(key)
    logits = 2.0 * jax.random.normal(k_x, (B, V), jnp.float32)
    targets = jax.random.randint(k_t, (B,), 0, V, jnp.int32)
    targets = targets.at[0].set(pad_idx)            # exercise pad-row masking

    loss = binary_cross_entropy(logits, targets, pad_idx=pad_idx, smoothing=smoothing,
                                mask_pad=True, block_b=64, block_v=256)
    loss = jax.block_until_ready(loss)

    ref = _reference_bce(logits, targets, pad_idx=pad_idx, smoothing=smoothing, mask_pad=True)
    ref = jax.block_until_ready(ref)

    assert loss.shape == (B,)
    assert bool(jnp.all(jnp.isfinite(loss))), "kernel produced non-finite loss"
    max_err = float(jnp.max(jnp.abs(loss - ref)))
    assert bool(jnp.allclose(loss, ref, rtol=1e-4, atol=1e-2)), f"mismatch: max abs err={max_err}"
    print("KERNEL_OK")
</pallas_src>

<mosaic_0001>
module attributes {stable_mosaic.version = 11 : i64} {
  func.func @kernel(%arg0: i32, %arg1: i32, %arg2: memref<8x256xf32, #tpu.memory_space<vmem>>, %arg3: memref<8x1xf32, #tpu.memory_space<vmem>>, %arg4: memref<8x128xf32, #tpu.memory_space<vmem>>) attributes {dimension_semantics = [#tpu.dimension_semantics<parallel>, #tpu.dimension_semantics<arbitrary>], iteration_bounds = array<i64: 2, 3>, scalar_prefetch = 0 : i64, scratch_operands = 1 : i64, tpu.core_type = #tpu.core_type<tc>, window_params = [{transform_indices = @transform_0, window_bounds = array<i64: 8, 256>}, {transform_indices = @transform_1, window_bounds = array<i64: 8, 1>}]} {
    %c0_i32 = arith.constant 0 : i32
    %0 = arith.cmpi eq, %arg1, %c0_i32 : i32
    %1 = arith.extui %0 : i1 to i32
    %c0_i32_0 = arith.constant 0 : i32
    %2 = arith.cmpi ne, %1, %c0_i32_0 : i32
    scf.if %2 {
      %cst = arith.constant 0.000000e+00 : f32
      %12 = vector.broadcast %cst : f32 to vector<8x128xf32>
      %c0 = arith.constant 0 : index
      %c0_6 = arith.constant 0 : index
      %13 = vector.load %arg4[%c0, %c0_6] : memref<8x128xf32, #tpu.memory_space<vmem>>, vector<8x128xf32>
      tpu.vector_store %arg4[%c0, %c0_6], %12 {strides = array<i32>} : memref<8x128xf32, #tpu.memory_space<vmem>>, vector<8x128xf32>,
    } else {
    }
    %c2_i32 = arith.constant 2 : i32
    %3 = arith.cmpi ne, %arg1, %c2_i32 : i32
    %4 = arith.extui %3 : i1 to i32
    %c0_i32_1 = arith.constant 0 : i32
    %5 = arith.cmpi ne, %4, %c0_i32_1 : i32
    scf.if %5 {
      %cst = arith.constant 0.000000e+00 : f32
      %12 = vector.broadcast %cst : f32 to vector<8x128xf32>
      %cst_6 = arith.constant 1.000000e+00 : f32
      %13 = vector.broadcast %cst_6 : f32 to vector<8x128xf32>
      %c0 = arith.constant 0 : index
      %c0_7 = arith.constant 0 : index
      %14 = vector.load %arg2[%c0, %c0_7] : memref<8x256xf32, #tpu.memory_space<vmem>>, vector<8x128xf32>
      %cst_8 = arith.constant 0.000000e+00 : f32
      %15 = vector.broadcast %cst_8 : f32 to vector<8x128xf32>
      %16 = arith.maximumf %14, %15 : vector<8x128xf32>
      %cst_9 = arith.constant 1.000000e-01 : f32
      %17 = vector.broadcast %cst_9 : f32 to vector<8x128xf32>
      %18 = arith.mulf %17, %14 : vector<8x128xf32>
      %19 = arith.subf %16, %18 : vector<8x128xf32>
      %20 = math.absf %14 : vector<8x128xf32>
      %cst_10 = arith.constant 0.000000e+00 : f32
      %21 = vector.broadcast %cst_10 : f32 to vector<8x128xf32>
      %22 = arith.subf %21, %20 : vector<8x128xf32>
      %23 = math.exp %22 : vector<8x128xf32>
      %24 = arith.addf %12, %19 : vector<8x128xf32>
      %cst_11 = arith.constant 1.000000e+00 : f32
      %25 = vector.broadcast %cst_11 : f32 to vector<8x128xf32>
      %26 = arith.addf %25, %23 : vector<8x128xf32>
      %27 = arith.mulf %13, %26 : vector<8x128xf32>
      %c0_12 = arith.constant 0 : index
      %c128 = arith.constant 128 : index
      %28 = vector.load %arg2[%c0_12, %c128] : memref<8x256xf32, #tpu.memory_space<vmem>>, vector<8x128xf32>
      %cst_13 = arith.constant 0.000000e+00 : f32
      %29 = vector.broadcast %cst_13 : f32 to vector<8x128xf32>
      %30 = arith.maximumf %28, %29 : vector<8x128xf32>
      %cst_14 = arith.constant 1.000000e-01 : f32
      %31 = vector.broadcast %cst_14 : f32 to vector<8x128xf32>
      %32 = arith.mulf %31, %28 : vector<8x128xf32>
      %33 = arith.subf %30, %32 : vector<8x128xf32>
      %34 = math.absf %28 : vector<8x128xf32>
      %cst_15 = arith.constant 0.000000e+00 : f32
      %35 = vector.broadcast %cst_15 : f32 to vector<8x128xf32>
      %36 = arith.subf %35, %34 : vector<8x128xf32>
      %37 = math.exp %36 : vector<8x128xf32>
      %38 = arith.addf %24, %33 : vector<8x128xf32>
      %cst_16 = arith.constant 1.000000e+00 : f32
      %39 = vector.broadcast %cst_16 : f32 to vector<8x128xf32>
      %40 = arith.addf %39, %37 : vector<8x128xf32>
      %41 = arith.mulf %27, %40 : vector<8x128xf32>
      %c0_17 = arith.constant 0 : index
      %c0_18 = arith.constant 0 : index
      %42 = vector.load %arg4[%c0_17, %c0_18] : memref<8x128xf32, #tpu.memory_space<vmem>>, vector<8x128xf32>
      %43 = math.log %41 : vector<8x128xf32>
      %44 = arith.addf %38, %43 : vector<8x128xf32>
      %45 = arith.addf %42, %44 : vector<8x128xf32>
      %c0_19 = arith.constant 0 : index
      %c0_20 = arith.constant 0 : index
      %46 = vector.load %arg4[%c0_19, %c0_20] : memref<8x128xf32, #tpu.memory_space<vmem>>, vector<8x128xf32>
      tpu.vector_store %arg4[%c0_19, %c0_20], %45 {strides = array<i32>} : memref<8x128xf32, #tpu.memory_space<vmem>>, vector<8x128xf32>,
    } else {
    }
    %c2_i32_2 = arith.constant 2 : i32
    %6 = arith.cmpi eq, %arg1, %c2_i32_2 : i32
    %7 = arith.extui %6 : i1 to i32
    %c0_i32_3 = arith.constant 0 : i32
    %8 = arith.cmpi ne, %7, %c0_i32_3 : i32
    scf.if %8 {
      %cst = arith.constant 0.000000e+00 : f32
      %12 = vector.broadcast %cst : f32 to vector<8x128xf32>
      %cst_6 = arith.constant 1.000000e+00 : f32
      %13 = vector.broadcast %cst_6 : f32 to vector<8x128xf32>
      %c0 = arith.constant 0 : index
      %c0_7 = arith.constant 0 : index
      %14 = vector.load %arg2[%c0, %c0_7] : memref<8x256xf32, #tpu.memory_space<vmem>>, vector<8x128xf32>
      %cst_8 = arith.constant 0.000000e+00 : f32
      %15 = vector.broadcast %cst_8 : f32 to vector<8x128xf32>
      %16 = arith.maximumf %14, %15 : vector<8x128xf32>
      %cst_9 = arith.constant 1.000000e-01 : f32
      %17 = vector.broadcast %cst_9 : f32 to vector<8x128xf32>
      %18 = arith.mulf %17, %14 : vector<8x128xf32>
      %19 = arith.subf %16, %18 : vector<8x128xf32>
      %20 = math.absf %14 : vector<8x128xf32>
      %cst_10 = arith.constant 0.000000e+00 : f32
      %21 = vector.broadcast %cst_10 : f32 to vector<8x128xf32>
      %22 = arith.subf %21, %20 : vector<8x128xf32>
      %23 = math.exp %22 : vector<8x128xf32>
      %24 = tpu.iota {dimensions = array<i32: 1>} : vector<8x128xi32>
      %c88_i32 = arith.constant 88 : i32
      %25 = vector.broadcast %c88_i32 : i32 to vector<8x128xi32>
      %26 = arith.cmpi slt, %24, %25 : vector<8x128xi32>
      %cst_11 = arith.constant 0.000000e+00 : f32
      %27 = vector.broadcast %cst_11 : f32 to vector<8x128xf32>
      %28 = arith.select %26, %19, %27 : vector<8x128xi1>, vector<8x128xf32>
      %cst_12 = arith.constant 0.000000e+00 : f32
      %29 = vector.broadcast %cst_12 : f32 to vector<8x128xf32>
      %30 = arith.select %26, %23, %29 : vector<8x128xi1>, vector<8x128xf32>
      %31 = arith.addf %12, %28 : vector<8x128xf32>
      %cst_13 = arith.constant 1.000000e+00 : f32
      %32 = vector.broadcast %cst_13 : f32 to vector<8x128xf32>
      %33 = arith.addf %32, %30 : vector<8x128xf32>
      %34 = arith.mulf %13, %33 : vector<8x128xf32>
      %c0_14 = arith.constant 0 : index
      %c0_15 = arith.constant 0 : index
      %35 = vector.load %arg4[%c0_14, %c0_15] : memref<8x128xf32, #tpu.memory_space<vmem>>, vector<8x128xf32>
      %36 = math.log %34 : vector<8x128xf32>
      %37 = arith.addf %31, %36 : vector<8x128xf32>
      %38 = arith.addf %35, %37 : vector<8x128xf32>
      %c0_16 = arith.constant 0 : index
      %c0_17 = arith.constant 0 : index
      %39 = vector.load %arg4[%c0_16, %c0_17] : memref<8x128xf32, #tpu.memory_space<vmem>>, vector<8x128xf32>
      tpu.vector_store %arg4[%c0_16, %c0_17], %38 {strides = array<i32>} : memref<8x128xf32, #tpu.memory_space<vmem>>, vector<8x128xf32>,
    } else {
    }
    %c2_i32_4 = arith.constant 2 : i32
    %9 = arith.cmpi eq, %arg1, %c2_i32_4 : i32
    %10 = arith.extui %9 : i1 to i32
    %c0_i32_5 = arith.constant 0 : i32
    %11 = arith.cmpi ne, %10, %c0_i32_5 : i32
    scf.if %11 {
      %c0 = arith.constant 0 : index
      %c0_6 = arith.constant 0 : index
      %12 = vector.load %arg4[%c0, %c0_6] : memref<8x128xf32, #tpu.memory_space<vmem>>, vector<8x128xf32>
      %cst = arith.constant dense<0.000000e+00> : vector<8xf32>
      %13 = vector.multi_reduction <add>, %12, %cst [1] : vector<8x128xf32> to vector<8xf32>
      %14 = vector.shape_cast %13 : vector<8xf32> to vector<8x1xf32>
      %c0_7 = arith.constant 0 : index
      %c0_8 = arith.constant 0 : index
      %15 = vector.load %arg3[%c0_7, %c0_8] : memref<8x1xf32, #tpu.memory_space<vmem>>, vector<8x1xf32>
      tpu.vector_store %arg3[%c0_7, %c0_8], %14 {strides = array<i32>} : memref<8x1xf32, #tpu.memory_space<vmem>>, vector<8x1xf32>,
    } else {
    }
    return
  }
  func.func @transform_0(%arg0: i32, %arg1: i32) -> (i32, i32) {
    %c0_i32 = arith.constant 0 : i32
    return %arg0, %arg1 : i32, i32
  }
  func.func @transform_1(%arg0: i32, %arg1: i32) -> (i32, i32) {
    %c0_i32 = arith.constant 0 : i32
    %c0_i32_0 = arith.constant 0 : i32
    return %arg0, %c0_i32 : i32, i32
  }
}

</mosaic_0001>

<llo_original>
// kernel: binary_cross_entropy.1
$region0: #{binary_cross_entropy.1}
  #allocation0 [shape = 'u32[]', space=smem, size = 0x4, offset = 0x4, fixed_abs, tag = 'smem constant byte address 0x4 - core index']
  #allocation1 [shape = 'u32[72,128]{1,0:T(1,128)}', space=vmem, size = 0x9000, scoped, tag = 'internal scratch']
  #allocation2 [shape = 'f32[8,128]{1,0:T(8,128)}', space=vmem, size = 0x1000, scoped, tag = 'scratch operand']
  %s0 = inlined_call_operand.hbm [shape: f32[13,600], index: 0, kind: input, shape index: {}]
  %s1 = inlined_call_operand.vmem [shape: f32[13,1], index: 1, kind: output, shape index: {}]
  %s2 = sld [smem:[#allocation0]]
  $region53: #{binary_cross_entropy.1} parent=0
    _
  %s4 = ssub.s32 1, %s2
  %s5 = scalar_select 0, %s4, %s2
  $region1: #{binary_cross_entropy.1} parent=0
    #allocation3 [shape = 'u8[16384]{0}', space=vmem, size = 0x4000, scoped, tag = 'input window, operand 0']
    #allocation4 [shape = 's32[2]{0}', space=sflag, size = 0x8, scoped, tag = 'scoped memory for binary_cross_entropy.1']
    %6 = vsyncpa [#allocation4], 0
    %s7 = scalar_lea.sflag [#allocation4], 1
    %8 = vsyncpa %s7, 0
    loop: start=0, step=1, limit=8
    $region2: #{binary_cross_entropy.1} parent=1 // loop_pre_header
      _
    $region3: #{binary_cross_entropy.1} parent=1 // loop_header
      %s10 = sphi 0, %s14
      %p11 = scmp.ge.s32.totalorder %s10, 8
      %s17 = sphi 0, %s29
      %s18 = sphi 0, %s25
      %s19 = sphi 0, %s17
      %s20 = sphi 0, %s18
      %s21 = sphi 0, %s19
      %s22 = sphi 0, %s20
      %s34 = sphi 0, %s36
      %s37 = sphi 0, %s34
      %s38 = sphi 0, %s37
      %s54 = sphi 0, %s38
      %s60 = sphi 0, %s62
      %s63 = sphi 0, %s60
      %s64 = sphi 0, %s63
      %s80 = sphi 0, %s64
    $region4: #{binary_cross_entropy.1} parent=1 // loop_header_branch
      %13 = sbr.rel (%p11) target = $region8
    $region5: #{binary_cross_entropy.1} parent=1 // loop_body
      %s15 = ssub.s32 %s10, 1
      %s16 = ssub.s32 %s10, 2
      %s23 = sadd.s32 1, %s18
      %p24 = scmp.ge.s32.totalorder %s23, 3
      %s25 = scalar_select %p24, 0, %s23
      %s26 = sadd.s32 1, %s17
      %s27 = scalar_select %p24, %s26, %s17
      %p28 = scmp.ge.s32.totalorder %s27, 2
      %s29 = scalar_select %p28, 0, %s27
      %s30 = ssub.s32 %s17, %s29
      %s31 = ssub.s32 %s18, %s25
      %s32 = sor.u32 %s30, %s31
      %p33 = scmp.eq.s32.totalorder %s32, 0
      %s35 = sadd.s32 %s34, 1
      %s36 = scalar_select %p33, %s34, %s35
      %p39 = pneg %p33
      %p40 = scmp.eq.s32.totalorder %s10, 5
      %p41 = por %p39, %p40
      %p42 = scmp.ne.s32.totalorder %s34, %s37
      %p43 = scmp.eq.s32.totalorder %s10, 0
      %p44 = por %p42, %p43
      %p45 = scmp.ne.s32.totalorder %s34, %s37
      %p46 = scmp.eq.s32.totalorder %s15, 5
      %p47 = por %p45, %p46
      %p48 = scmp.ne.s32.totalorder %s37, %s38
      %p49 = scmp.eq.s32.totalorder %s15, 0
      %p50 = por %p48, %p49
      %p51 = scmp.ne.s32.totalorder %s37, %s38
      %p52 = scmp.eq.s32.totalorder %s16, 5
      %p53 = por %p51, %p52
      %p55 = scmp.ne.s32.totalorder %s38, %s54
      %p56 = scmp.eq.s32.totalorder %s16, 0
      %p57 = por %p55, %p56
      %s58 = ssub.s32 %s17, %s29
      %p59 = scmp.eq.s32.totalorder %s58, 0
      %s61 = sadd.s32 %s60, 1
      %s62 = scalar_select %p59, %s60, %s61
      %p65 = pneg %p59
      %p66 = scmp.eq.s32.totalorder %s10, 5
      %p67 = por %p65, %p66
      %p68 = scmp.ne.s32.totalorder %s60, %s63
      %p69 = scmp.eq.s32.totalorder %s10, 0
      %p70 = por %p68, %p69
      %p71 = scmp.ne.s32.totalorder %s60, %s63
      %p72 = scmp.eq.s32.totalorder %s15, 5
      %p73 = por %p71, %p72
      %p74 = scmp.ne.s32.totalorder %s63, %s64
      %p75 = scmp.eq.s32.totalorder %s15, 0
      %p76 = por %p74, %p75
      %p77 = scmp.ne.s32.totalorder %s63, %s64
      %p78 = scmp.eq.s32.totalorder %s16, 5
      %p79 = por %p77, %p78
      %p81 = scmp.ne.s32.totalorder %s64, %s80
      %p82 = scmp.eq.s32.totalorder %s16, 0
      %p83 = por %p81, %p82
      %p84 = scmp.le.s32.totalorder 1, %s10
      %p85 = scmp.lt.s32.totalorder %s10, 7
      %p86 = pnand %p84, %p85
      %p87 = pneg %p86
      // Predicated region
      $region9: #{binary_cross_entropy.1} parent=5 // pred_check
        _
      $region10: #{binary_cross_entropy.1} parent=5 // pred_check_branch
        %89 = sbr.rel (%p86) target = $region12
      $region11: #{binary_cross_entropy.1} parent=5 // pred_region
        %s90 = ssub.s32 %s10, 1
      $region12: #{binary_cross_entropy.1} parent=5 // pred_fallthru
        _
      %p91 = scmp.lt.s32.totalorder %s10, 6
      // Predicated region
      $region13: #{binary_cross_entropy.1} parent=5 // pred_check
        %p92 = pneg %p91
      $region14: #{binary_cross_entropy.1} parent=5 // pred_check_branch
        %94 = sbr.rel (%p92) target = $region16
      $region15: #{binary_cross_entropy.1} parent=5 // pred_region
        // Predicated region
        $region17: #{binary_cross_entropy.1} parent=15 // pred_check
          %p95 = pneg %p44
        $region18: #{binary_cross_entropy.1} parent=15 // pred_check_branch
          %97 = sbr.rel (%p95) target = $region20
        $region19: #{binary_cross_entropy.1} parent=15 // pred_region
          %s98 = sand.u32 %s34, 1
          %s99 = scalar_lea.sflag [#allocation4], %s98
          %s100 = sand.u32 %s34, 1
          %s101 = smul.addr %s100, 16
          %s102 = scalar_lea.vmem [#allocation3], %s101
          %s103 = smul.u32 2, %s18
          %s104 = ssub.s32 5, %s103
          %p105 = scmp.lt.s32.totalorder %s104, 2
          %s106 = scalar_select %p105, %s104, 2
          %s107 = smul.u32 8, %s106
          %s108 = ssub.s32 16, %s107
          %s109 = sshll.u32 %s108, 4
          %110 = vsyncadd %s99, %s109
          %p111 = scmp.ne.s32.totalorder 0, %s107
          %s112 = smul.addr %s17, 5
          %s113 = sadd.s32 %s103, %s112
          %s114 = smul.addr %s113, 8
          %s115 = scalar_lea.hbm %s0, %s114
          %s116 = smul.u32 %s106, 8
          %s117 = sshll.u32 %s116, 4
          %s118 = sshll.u32 %s115, 4
          %s119 = int_to_ptr.hbm [resolvable:$true] %s118
          %s120 = sshll.u32 %s102, 4
          %s121 = int_to_ptr.vmem [resolvable:$true] %s120
          %123 = dma.hbm_to_vmem [thread:$0]  (%p111), %s119, %s117, %s121, %s99
        $region20: #{binary_cross_entropy.1} parent=15 // pred_fallthru
          _
      $region16: #{binary_cross_entropy.1} parent=5 // pred_fallthru
        _
      %p124 = scmp.le.s32.totalorder 1, %s10
      %p125 = scmp.lt.s32.totalorder %s10, 7
      %p126 = pnand %p124, %p125
      %p127 = pneg %p126
      // Predicated region
      $region21: #{binary_cross_entropy.1} parent=5 // pred_check
        _
      $region22: #{binary_cross_entropy.1} parent=5 // pred_check_branch
        %129 = sbr.rel (%p126) target = $region24
      $region23: #{binary_cross_entropy.1} parent=5 // pred_region
        %s130 = ssub.s32 %s10, 1
        %s131 = sand.u32 %s37, 1
        %s132 = scalar_lea.sflag [#allocation4], %s131
        %s133 = sand.u32 %s37, 1
        %s134 = smul.addr %s133, 16
        %s135 = scalar_lea.vmem [#allocation3], %s134
        // Predicated region
        $region25: #{binary_cross_entropy.1} parent=23 // pred_check
          %p136 = pneg %p50
        $region26: #{binary_cross_entropy.1} parent=23 // pred_check_branch
          %138 = sbr.rel (%p136) target = $region28
        $region27: #{binary_cross_entropy.1} parent=23 // pred_region
          %140 = dma.done %s132, 256
        $region28: #{binary_cross_entropy.1} parent=23 // pred_fallthru
          _
        %s141 = sand.u32 %s37, 1
        %s142 = scalar_lea.sflag [#allocation4], %s141
        %s143 = sand.u32 %s37, 1
        %s144 = smul.addr %s143, 16
        %s145 = scalar_lea.vmem [#allocation3], %s144
        %p146 = pneg %p50
        %p147 = pneg %p47
        %p148 = pneg %p76
        %p149 = pneg %p73
        %p150 = scmp.lt.s32.totalorder %s19, 1
        %s151 = scalar_select %p150, %s19, 1
        %s152 = smul.addr %s151, 8
        %s153 = scalar_lea.vmem %s1, %s152
        %s154 = smul.u32 2, %s20
        %s155 = ssub.s32 5, %s154
        %p156 = scmp.lt.s32.totalorder %s155, 2
        %s157 = scalar_select %p156, %s155, 2
        %s158 = smul.u32 8, %s157
        %p159 = scmp.lt.s32.totalorder %s19, 1
        %s160 = scalar_select %p159, %s19, 1
        %s161 = smul.addr %s160, 8
        %s162 = scalar_lea.vmem %s1, %s161
        %p163 = scmp.eq.s32.totalorder %s20, 0
        // Predicated region
        $region29: #{binary_cross_entropy.1} parent=23 // pred_check
          %p164 = pneg %p163
        $region30: #{binary_cross_entropy.1} parent=23 // pred_check_branch
          %166 = sbr.rel (%p164) target = $region32
        $region31: #{binary_cross_entropy.1} parent=23 // pred_region
          %167 = vst [vmem:[#allocation2] sm:$0xff] 0.0
        $region32: #{binary_cross_entropy.1} parent=23 // pred_fallthru
          _
        %p168 = scmp.ne.s32.totalorder %s20, 2
        // Predicated region
        $region33: #{binary_cross_entropy.1} parent=23 // pred_check
          %p169 = pneg %p168
        $region34: #{binary_cross_entropy.1} parent=23 // pred_check_branch
          %171 = sbr.rel (%p169) target = $region36
        $region35: #{binary_cross_entropy.1} parent=23 // pred_region
          %v172 = vld [vmem:[%s135] sm:$0xff]
          %v173 = vmax.f32 %v172, 0.0
          %v174 = vmul.f32 %v172, 0.1
          %v175 = vsub.f32 %v173, %v174
          %v176 = vand.u32 2147483647, %v172
          %v177 = vsub.f32 0.0, %v176
          %v178 = vmul.f32 %v177, 1.442695
          %v179 = vpow.pop %v178
          %v180 = vadd.f32 %v175, 0.0
          %v181 = vadd.f32 %v179, 1.0
          %v182 = vld [vmem:[%s135 + $0x8] sm:$0xff]
          %v183 = vmax.f32 %v182, 0.0
          %v184 = vmul.f32 %v182, 0.1
          %v185 = vsub.f32 %v183, %v184
          %v186 = vand.u32 2147483647, %v182
          %v187 = vsub.f32 0.0, %v186
          %v188 = vmul.f32 %v187, 1.442695
          %v189 = vpow.pop %v188
          %v190 = vadd.f32 %v180, %v185
          %v191 = vadd.f32 %v189, 1.0
          %v192 = vmul.f32 %v181, %v191
          %v193 = vld [vmem:[#allocation2] sm:$0xff]
          %v194 = vlog2.pop %v192
          %v195 = vmul.f32 %v194, 0.6931472
          %v196 = vadd.f32 %v190, %v195
          %v197 = vadd.f32 %v193, %v196
          %198 = vst [vmem:[#allocation2] sm:$0xff] %v197
        $region36: #{binary_cross_entropy.1} parent=23 // pred_fallthru
          _
        %p199 = scmp.eq.s32.totalorder %s20, 2
        // Predicated region
        $region37: #{binary_cross_entropy.1} parent=23 // pred_check
          %p200 = pneg %p199
        $region38: #{binary_cross_entropy.1} parent=23 // pred_check_branch
          %202 = sbr.rel (%p200) target = $region40
        $region39: #{binary_cross_entropy.1} parent=23 // pred_region
          %v203 = vld [vmem:[%s135] sm:$0xff]
          %v204 = vmax.f32 %v203, 0.0
          %v205 = vmul.f32 %v203, 0.1
          %v206 = vsub.f32 %v204, %v205
          %v207 = vand.u32 2147483647, %v203
          %v208 = vsub.f32 0.0, %v207
          %v209 = vmul.f32 %v208, 1.442695
          %v210 = vpow.pop %v209
          %v211 = vlaneseq
          %v212 = vand.u32 %v211, 127
          %vm213 = vcmp.lt.s32.totalorder %v212, 88
          %v214 = vsel %vm213, %v206, 0.0
          %v215 = vsel %vm213, %v210, 0.0
          %v216 = vadd.f32 %v214, 0.0
          %v217 = vadd.f32 %v215, 1.0
          %v218 = vld [vmem:[#allocation2] sm:$0xff]
          %v219 = vlog2.pop %v217
          %v220 = vmul.f32 %v219, 0.6931472
          %v221 = vadd.f32 %v216, %v220
          %v222 = vadd.f32 %v218, %v221
          %223 = vst [vmem:[#allocation2] sm:$0xff] %v222
          %v224 = vld [vmem:[#allocation2] sm:$0xff]
          %225 = vadd.xlane.f32.xlu0 %v224
          %v226 = vpop.xlane.xlu0 %225
          %vm227 = vcmask 7168
          %228 = vst.msk [vmem:[%s162] sm:$0xff] %vm227, %v226
        $region40: #{binary_cross_entropy.1} parent=23 // pred_fallthru
          _
        %p229 = scmp.lt.s32.totalorder %s19, 1
        %s230 = scalar_select %p229, %s19, 1
        %s231 = smul.addr %s230, 8
        %s232 = scalar_lea.vmem %s1, %s231
        // Predicated region
        $region41: #{binary_cross_entropy.1} parent=23 // pred_check
          %p233 = pneg %p73
        $region42: #{binary_cross_entropy.1} parent=23 // pred_check_branch
          %235 = sbr.rel (%p233) target = $region44
        $region43: #{binary_cross_entropy.1} parent=23 // pred_region
          _
        $region44: #{binary_cross_entropy.1} parent=23 // pred_fallthru
          _
      $region24: #{binary_cross_entropy.1} parent=5 // pred_fallthru
        _
      %p236 = scmp.le.s32.totalorder 2, %s10
      // Predicated region
      $region45: #{binary_cross_entropy.1} parent=5 // pred_check
        %p237 = pneg %p236
      $region46: #{binary_cross_entropy.1} parent=5 // pred_check_branch
        %239 = sbr.rel (%p237) target = $region48
      $region47: #{binary_cross_entropy.1} parent=5 // pred_region
        %s240 = ssub.s32 %s10, 2
        // Predicated region
        $region49: #{binary_cross_entropy.1} parent=47 // pred_check
          %p241 = pneg %p79
        $region50: #{binary_cross_entropy.1} parent=47 // pred_check_branch
          %243 = sbr.rel (%p241) target = $region52
        $region51: #{binary_cross_entropy.1} parent=47 // pred_region
          %p244 = scmp.lt.s32.totalorder %s21, 1
          %s245 = scalar_select %p244, %s21, 1
          %s246 = smul.addr %s245, 8
          %s247 = scalar_lea.vmem %s1, %s246
        $region52: #{binary_cross_entropy.1} parent=47 // pred_fallthru
          _
      $region48: #{binary_cross_entropy.1} parent=5 // pred_fallthru
        _
    $region6: #{binary_cross_entropy.1} parent=1 // loop_footer
      %s14 = sadd.s32 1, %s10
    $region7: #{binary_cross_entropy.1} parent=1 // loop_footer_branch
      %9 = sbr.rel target = $region3
    $region8: #{binary_cross_entropy.1} parent=1 // loop_exit
      _
    %248 = vsyncpa [#allocation4], 1
    %s249 = scalar_lea.sflag [#allocation4], 1
    %250 = vsyncpa %s249, 1

</llo_original>
